<compile_context>
chip_gen: v7x
topology: tpu7x:2x2x1
jax: 0.10.0
libtpu: 0.0.40
codegen_flags: <defaults>
</compile_context>

<pallas_src>
import functools

import jax
import jax.numpy as jnp
from jax.experimental import pallas as pl
from jax.experimental.pallas import tpu as pltpu


def _round_up(x, m):
    return ((x + m - 1) // m) * m


def _node_proj_kernel(feat_ref, wT_ref, p_ref):
    # feat_ref: (TN, F) node-feature tile; wT_ref: (F, 2C) fused weights (resident)
    p_ref[...] = jnp.dot(
        feat_ref[...], wT_ref[...], preferred_element_type=jnp.float32
    ).astype(p_ref.dtype)


def _edge_score_kernel(ps_ref, pd_ref, b_ref, out_ref):
    # ps_ref/pd_ref: (TE, 2C) projected endpoint tiles; b_ref: (1, 2C) fused bias
    out_ref[...] = (ps_ref[...] - pd_ref[...] + b_ref[...]).astype(out_ref.dtype)


@functools.partial(jax.jit, static_argnames=("node_tile", "edge_tile"))
def score_predictor(features, src, dst, W_w, b_w, W_x, b_x, *,
                    node_tile=512, edge_tile=8192):
    """features: [N, F] f32; src/dst: [E] i32; W_*: [C, F]; b_*: [C] -> (w, x) [E, C]."""
    N, F = features.shape
    C = W_w.shape[0]
    E = src.shape[0]
    C2 = 2 * C

    # f32 sublane requirement (8-row granularity) for both tile sizes.
    assert node_tile % 8 == 0, "node_tile must be a multiple of 8"
    assert edge_tile % 8 == 0, "edge_tile must be a multiple of 8"

    # Fuse the two Linears into one weight/bias: [F, 2C] and [1, 2C].
    W_cat_T = jnp.concatenate([W_w, W_x], axis=0).T.astype(jnp.float32)   # [F, 2C]
    b_cat = jnp.concatenate([b_w, b_x]).reshape(1, C2).astype(jnp.float32)

    # ---------------- Stage 1: node projection P = features @ W_cat^T ----------------
    tn = min(node_tile, _round_up(N, 8))
    N_pad = _round_up(N, tn)
    feats = features.astype(jnp.float32)
    if N_pad != N:
        feats = jnp.pad(feats, ((0, N_pad - N), (0, 0)))

    P = pl.pallas_call(
        _node_proj_kernel,
        out_shape=jax.ShapeDtypeStruct((N_pad, C2), jnp.float32),
        grid_spec=pltpu.PrefetchScalarGridSpec(
            num_scalar_prefetch=0,
            grid=(N_pad // tn,),
            in_specs=[pl.BlockSpec((tn, F), lambda i: (i, 0)),
                      pl.BlockSpec((F, C2), lambda i: (0, 0))],
            out_specs=pl.BlockSpec((tn, C2), lambda i: (i, 0)),
        ),
        compiler_params=pltpu.CompilerParams(
            dimension_semantics=("parallel",)),
    )(feats, W_cat_T)

    # ---------------- glue: per-edge endpoint gather (only 2C floats each) -----------
    # TODO(synk): data-dependent row gather stays as jnp.take glue; an in-kernel
    # dynamic gather over a VMEM-resident P is not cleanly expressible with
    # BlockSpecs at useful tile sizes.
    p_src = jnp.take(P, src, axis=0)                         # [E, 2C]
    p_dst = jnp.take(P, dst, axis=0)                         # [E, 2C]

    te = min(edge_tile, _round_up(E, 8))
    E_pad = _round_up(E, te)
    if E_pad != E:
        pad = ((0, E_pad - E), (0, 0))
        p_src = jnp.pad(p_src, pad)
        p_dst = jnp.pad(p_dst, pad)

    # ---------------- Stage 2: edge difference + bias, fused 2C-wide output ----------
    edge_spec = pl.BlockSpec((te, C2), lambda i: (i, 0))
    out_pad = pl.pallas_call(
        _edge_score_kernel,
        out_shape=jax.ShapeDtypeStruct((E_pad, C2), jnp.float32),
        grid_spec=pltpu.PrefetchScalarGridSpec(
            num_scalar_prefetch=0,
            grid=(E_pad // te,),
            in_specs=[edge_spec, edge_spec,
                      pl.BlockSpec((1, C2), lambda i: (0, 0))],
            out_specs=edge_spec,
        ),
        compiler_params=pltpu.CompilerParams(
            dimension_semantics=("parallel",)),
    )(p_src, p_dst, b_cat)

    out = out_pad[:E]                      # padded rows equal the bias -> must slice
    return out[:, :C], out[:, C:]


if __name__ == "__main__":
    # Small, deterministic problem: 8 nodes, 32 features, 4 classes, 12 edges.
    N, F, C, E = 8, 32, 4, 12

    key = jax.random.PRNGKey(0)
    k_feat, k_src, k_dst, k_ww, k_bw, k_wx, k_bx = jax.random.split(key, 7)

    features = jax.random.normal(k_feat, (N, F), dtype=jnp.float32)
    src = jax.random.randint(k_src, (E,), 0, N, dtype=jnp.int32)
    dst = jax.random.randint(k_dst, (E,), 0, N, dtype=jnp.int32)

    # Deterministic "Linear" parameter init (uniform, like torch default scale).
    bound = 1.0 / (F ** 0.5)
    W_w = jax.random.uniform(k_ww, (C, F), jnp.float32, -bound, bound)
    b_w = jax.random.uniform(k_bw, (C,), jnp.float32, -bound, bound)
    W_x = jax.random.uniform(k_wx, (C, F), jnp.float32, -bound, bound)
    b_x = jax.random.uniform(k_bx, (C,), jnp.float32, -bound, bound)

    w_out, x_out = score_predictor(features, src, dst, W_w, b_w, W_x, b_x)
    jax.block_until_ready((w_out, x_out))

    # Pure-JAX reference check (original formulation).
    score_ref = features[src] - features[dst]
    w_ref = score_ref @ W_w.T + b_w
    x_ref = score_ref @ W_x.T + b_x
    assert w_out.shape == (E, C) and x_out.shape == (E, C)
    assert jnp.allclose(w_out, w_ref, atol=1e-4, rtol=1e-4)
    assert jnp.allclose(x_out, x_ref, atol=1e-4, rtol=1e-4)

    print("KERNEL_OK")
</pallas_src>

<mosaic_0001>
module attributes {stable_mosaic.version = 11 : i64} {
  func.func @_node_proj_kernel(%arg0: i32, %arg1: memref<8x32xf32, #tpu.memory_space<vmem>>, %arg2: memref<32x8xf32, #tpu.memory_space<vmem>>, %arg3: memref<8x8xf32, #tpu.memory_space<vmem>>) attributes {dimension_semantics = [#tpu.dimension_semantics<parallel>], iteration_bounds = array<i64: 1>, scalar_prefetch = 0 : i64, scratch_operands = 0 : i64, tpu.core_type = #tpu.core_type<tc>, window_params = [{transform_indices = @transform_0, window_bounds = array<i64: 8, 32>}, {pipeline_mode = #tpu.pipeline_mode<synchronous>, transform_indices = @transform_1, window_bounds = array<i64: 32, 8>}, {transform_indices = @transform_2, window_bounds = array<i64: 8, 8>}]} {
    %c0 = arith.constant 0 : index
    %c0_0 = arith.constant 0 : index
    %0 = vector.load %arg1[%c0, %c0_0] : memref<8x32xf32, #tpu.memory_space<vmem>>, vector<8x32xf32>
    %c0_1 = arith.constant 0 : index
    %c0_2 = arith.constant 0 : index
    %1 = vector.load %arg2[%c0_1, %c0_2] : memref<32x8xf32, #tpu.memory_space<vmem>>, vector<32x8xf32>
    %cst = arith.constant dense<0.000000e+00> : vector<8x8xf32>
    %2 = tpu.matmul %0, %1, %cst {dimension_numbers = #tpu.dot_dimension_numbers<[1], [0], [0], [1], [0, 0, 1, 1], [], []>} : vector<8x32xf32>, vector<32x8xf32>, vector<8x8xf32> -> vector<8x8xf32>
    %c0_3 = arith.constant 0 : index
    %c0_4 = arith.constant 0 : index
    %3 = vector.load %arg3[%c0_3, %c0_4] : memref<8x8xf32, #tpu.memory_space<vmem>>, vector<8x8xf32>
    tpu.vector_store %arg3[%c0_3, %c0_4], %2 {strides = array<i32>} : memref<8x8xf32, #tpu.memory_space<vmem>>, vector<8x8xf32>,
    return
  }
  func.func @transform_0(%arg0: i32) -> (i32, i32) {
    %c0_i32 = arith.constant 0 : i32
    %c0_i32_0 = arith.constant 0 : i32
    return %arg0, %c0_i32 : i32, i32
  }
  func.func @transform_1(%arg0: i32) -> (i32, i32) {
    %c0_i32 = arith.constant 0 : i32
    %c0_i32_0 = arith.constant 0 : i32
    %c0_i32_1 = arith.constant 0 : i32
    return %c0_i32, %c0_i32_0 : i32, i32
  }
  func.func @transform_2(%arg0: i32) -> (i32, i32) {
    %c0_i32 = arith.constant 0 : i32
    %c0_i32_0 = arith.constant 0 : i32
    return %arg0, %c0_i32 : i32, i32
  }
}

module attributes {stable_mosaic.version = 11 : i64} {
  func.func @_edge_score_kernel(%arg0: i32, %arg1: memref<16x8xf32, #tpu.memory_space<vmem>>, %arg2: memref<16x8xf32, #tpu.memory_space<vmem>>, %arg3: memref<1x8xf32, #tpu.memory_space<vmem>>, %arg4: memref<16x8xf32, #tpu.memory_space<vmem>>) attributes {dimension_semantics = [#tpu.dimension_semantics<parallel>], iteration_bounds = array<i64: 1>, scalar_prefetch = 0 : i64, scratch_operands = 0 : i64, tpu.core_type = #tpu.core_type<tc>, window_params = [{transform_indices = @transform_0, window_bounds = array<i64: 16, 8>}, {transform_indices = @transform_1, window_bounds = array<i64: 16, 8>}, {pipeline_mode = #tpu.pipeline_mode<synchronous>, transform_indices = @transform_2, window_bounds = array<i64: 1, 8>}, {transform_indices = @transform_3, window_bounds = array<i64: 16, 8>}]} {
    %c0 = arith.constant 0 : index
    %c0_0 = arith.constant 0 : index
    %0 = vector.load %arg1[%c0, %c0_0] : memref<16x8xf32, #tpu.memory_space<vmem>>, vector<16x8xf32>
    %c0_1 = arith.constant 0 : index
    %c0_2 = arith.constant 0 : index
    %1 = vector.load %arg2[%c0_1, %c0_2] : memref<16x8xf32, #tpu.memory_space<vmem>>, vector<16x8xf32>
    %2 = arith.subf %0, %1 : vector<16x8xf32>
    %c0_3 = arith.constant 0 : index
    %c0_4 = arith.constant 0 : index
    %3 = vector.load %arg3[%c0_3, %c0_4] : memref<1x8xf32, #tpu.memory_space<vmem>>, vector<1x8xf32>
    %4 = vector.broadcast %3 : vector<1x8xf32> to vector<16x8xf32>
    %5 = arith.addf %2, %4 : vector<16x8xf32>
    %c0_5 = arith.constant 0 : index
    %c0_6 = arith.constant 0 : index
    %6 = vector.load %arg4[%c0_5, %c0_6] : memref<16x8xf32, #tpu.memory_space<vmem>>, vector<16x8xf32>
    tpu.vector_store %arg4[%c0_5, %c0_6], %5 {strides = array<i32>} : memref<16x8xf32, #tpu.memory_space<vmem>>, vector<16x8xf32>,
    return
  }
  func.func @transform_0(%arg0: i32) -> (i32, i32) {
    %c0_i32 = arith.constant 0 : i32
    %c0_i32_0 = arith.constant 0 : i32
    return %arg0, %c0_i32 : i32, i32
  }
  func.func @transform_1(%arg0: i32) -> (i32, i32) {
    %c0_i32 = arith.constant 0 : i32
    %c0_i32_0 = arith.constant 0 : i32
    return %arg0, %c0_i32 : i32, i32
  }
  func.func @transform_2(%arg0: i32) -> (i32, i32) {
    %c0_i32 = arith.constant 0 : i32
    %c0_i32_0 = arith.constant 0 : i32
    %c0_i32_1 = arith.constant 0 : i32
    return %c0_i32, %c0_i32_0 : i32, i32
  }
  func.func @transform_3(%arg0: i32) -> (i32, i32) {
    %c0_i32 = arith.constant 0 : i32
    %c0_i32_0 = arith.constant 0 : i32
    return %arg0, %c0_i32 : i32, i32
  }
}

</mosaic_0001>

<llo_original>
// kernel: score_predictor.2
$region0: #{score_predictor.2}
  #allocation0 [shape = 'u32[]', space=smem, size = 0x4, offset = 0x4, fixed_abs, tag = 'smem constant byte address 0x4 - core index']
  #allocation1 [shape = 'u32[144,128]{1,0:T(1,128)}', space=vmem, size = 0x12000, scoped, tag = 'internal scratch']
  %s0 = inlined_call_operand.vmem [shape: f32[8,32], index: 0, kind: input, shape index: {}]
  %s1 = inlined_call_operand.vmem [shape: f32[32,8], index: 1, kind: input, shape index: {}]
  %s2 = inlined_call_operand.vmem [shape: f32[8,8], index: 2, kind: output, shape index: {}]
  %s3 = sld [smem:[#allocation0]]
  $region18: #{score_predictor.2} parent=0
    _
  %s5 = ssub.s32 1, %s3
  %s6 = scalar_select 0, %s5, %s3
  // Predicated region
  $region2: #{score_predictor.2} parent=0 // pred_check
    _
  $region3: #{score_predictor.2} parent=0 // pred_check_branch
    %8 = sbr.rel (0) target = $region5
  $region4: #{score_predictor.2} parent=0 // pred_region
    _
  $region5: #{score_predictor.2} parent=0 // pred_fallthru
    _
  // Predicated region
  $region6: #{score_predictor.2} parent=0 // pred_check
    _
  $region7: #{score_predictor.2} parent=0 // pred_check_branch
    %10 = sbr.rel (0) target = $region9
  $region8: #{score_predictor.2} parent=0 // pred_region
    _
  $region9: #{score_predictor.2} parent=0 // pred_fallthru
    _
  %v11 = vld [vmem:[%s0] sm:$0xff]
  %v12 = vld [vmem:[%s1] sm:$0xff]
  %v13 = vld [vmem:[%s1 + $0x8] sm:$0xff]
  %v14 = vld [vmem:[%s1 + $0x10] sm:$0xff]
  %v15 = vld [vmem:[%s1 + $0x18] sm:$0xff]
  %vm16 = vcmask 261120
  %v18 = vsel %vm16, %v11, 0
  %20 = vmatprep.subr.mxu0 0.0
  %21 = vmatpush1.msra.mxu0 %v12
  %22 = vmatprep.subr.mxu0 0.0
  %23 = vmatpush1.msra.mxu0 %v13
  %24 = vmatprep.subr.mxu0 0.0
  %25 = vmatpush1.msra.mxu0 %v14
  %26 = vmatprep.subr.mxu0 0.0
  %27 = vmatpush1.msra.mxu0 %v15
  %28 = vmatprep.subr.mxu0 0.0
  %29 = vmatpush1.msra.mxu0 0.0
  %30 = vmatprep.subr.mxu0 0.0
  %31 = vmatpush1.msra.mxu0 0.0
  %32 = vmatprep.subr.mxu0 0.0
  %33 = vmatpush1.msra.mxu0 0.0
  %34 = vmatprep.subr.mxu0 0.0
  %35 = vmatpush1.msra.mxu0 0.0
  %36 = vmatprep.subr.mxu0 0.0
  %37 = vmatpush1.msra.mxu0 0.0
  %38 = vmatprep.subr.mxu0 0.0
  %39 = vmatpush1.msra.mxu0 0.0
  %40 = vmatprep.subr.mxu0 0.0
  %41 = vmatpush1.msra.mxu0 0.0
  %42 = vmatprep.subr.mxu0 0.0
  %43 = vmatpush1.msra.mxu0 0.0
  %44 = vmatprep.subr.mxu0 0.0
  %45 = vmatpush1.msra.mxu0 0.0
  %46 = vmatprep.subr.mxu0 0.0
  %47 = vmatpush1.msra.mxu0 0.0
  %48 = vmatprep.subr.mxu0 0.0
  %49 = vmatpush1.msra.mxu0 0.0
  %50 = vmatprep.subr.mxu0 0.0
  %51 = vmatpush1.msra.mxu0 0.0
  %52 = vmatprep.subr.mxu0 0.0
  %53 = vmatpush1.msra.mxu0 0.0
  %54 = vmatprep.subr.mxu0 0.0
  %55 = vmatpush1.msra.mxu0 0.0
  %56 = vmatprep.subr.mxu0 0.0
  %57 = vmatpush1.msra.mxu0 0.0
  %58 = vmatprep.subr.mxu0 0.0
  %59 = vmatpush1.msra.mxu0 0.0
  %60 = vmatprep.subr.mxu0 0.0
  %61 = vmatpush1.msra.mxu0 0.0
  %62 = vmatprep.subr.mxu0 0.0
  %63 = vmatpush1.msra.mxu0 0.0
  %64 = vmatprep.subr.mxu0 0.0
  %65 = vmatpush1.msra.mxu0 0.0
  %66 = vmatprep.subr.mxu0 0.0
  %67 = vmatpush1.msra.mxu0 0.0
  %68 = vmatprep.subr.mxu0 0.0
  %69 = vmatpush1.msra.mxu0 0.0
  %70 = vmatprep.subr.mxu0 0.0
  %71 = vmatpush1.msra.mxu0 0.0
  %72 = vmatprep.subr.mxu0 0.0
  %73 = vmatpush1.msra.mxu0 0.0
  %74 = vmatprep.subr.mxu0 0.0
  %75 = vmatpush1.msra.mxu0 0.0
  %76 = vmatprep.subr.mxu0 0.0
  %77 = vmatpush1.msra.mxu0 0.0
  %78 = vmatprep.subr.mxu0 0.0
  %79 = vmatpush1.msra.mxu0 0.0
  %80 = vmatprep.subr.mxu0 0.0
  %81 = vmatpush1.msra.mxu0 0.0
  %82 = vmatprep.subr.mxu0 0.0
  %83 = vmatpush1.msra.mxu0 0.0
  %84 = vmatprep.mubr.f32.mxu0 0.0
  %85 = vmatmul.mubr.f32.gmra.mrb[0].mxu0 %v18
  %v86 = vpop.f32.mrb[0].mxu0
  %v87 = vadd.f32 0.0, %v86
  %v88 = vpop.f32.mrb[0].mxu0
  %89 = vdwg.mxu0
  %vm90 = vcmask 64512
  %91 = vst.msk [vmem:[%s2] sm:$0xff] %vm90, %v87
  // Predicated region
  $region10: #{score_predictor.2} parent=0 // pred_check
    _
  $region11: #{score_predictor.2} parent=0 // pred_check_branch
    %93 = sbr.rel (0) target = $region13
  $region12: #{score_predictor.2} parent=0 // pred_region
    _
  $region13: #{score_predictor.2} parent=0 // pred_fallthru
    _
  // Predicated region
  $region14: #{score_predictor.2} parent=0 // pred_check
    _
  $region15: #{score_predictor.2} parent=0 // pred_check_branch
    %95 = sbr.rel (0) target = $region17
  $region16: #{score_predictor.2} parent=0 // pred_region
    _
  $region17: #{score_predictor.2} parent=0 // pred_fallthru
    _

// kernel: score_predictor.3
$region0: #{score_predictor.3}
  #allocation0 [shape = 'u32[]', space=smem, size = 0x4, offset = 0x4, fixed_abs, tag = 'smem constant byte address 0x4 - core index']
  #allocation1 [shape = 'u32[144,128]{1,0:T(1,128)}', space=vmem, size = 0x12000, scoped, tag = 'internal scratch']
  %s0 = inlined_call_operand.vmem [shape: f32[16,8], index: 0, kind: input, shape index: {}]
  %s1 = inlined_call_operand.vmem [shape: f32[16,8], index: 1, kind: input, shape index: {}]
  %s2 = inlined_call_operand.vmem [shape: f32[1,8], index: 2, kind: input, shape index: {}]
  %s3 = inlined_call_operand.vmem [shape: f32[16,8], index: 3, kind: output, shape index: {}]
  %s4 = sld [smem:[#allocation0]]
  $region22: #{score_predictor.3} parent=0
    _
  %s6 = ssub.s32 1, %s4
  %s7 = scalar_select 0, %s6, %s4
  // Predicated region
  $region2: #{score_predictor.3} parent=0 // pred_check
    _
  $region3: #{score_predictor.3} parent=0 // pred_check_branch
    %9 = sbr.rel (0) target = $region5
  $region4: #{score_predictor.3} parent=0 // pred_region
    _
  $region5: #{score_predictor.3} parent=0 // pred_fallthru
    _
  // Predicated region
  $region6: #{score_predictor.3} parent=0 // pred_check
    _
  $region7: #{score_predictor.3} parent=0 // pred_check_branch
    %11 = sbr.rel (0) target = $region9
  $region8: #{score_predictor.3} parent=0 // pred_region
    _
  $region9: #{score_predictor.3} parent=0 // pred_fallthru
    _
  // Predicated region
  $region10: #{score_predictor.3} parent=0 // pred_check
    _
  $region11: #{score_predictor.3} parent=0 // pred_check_branch
    %13 = sbr.rel (0) target = $region13
  $region12: #{score_predictor.3} parent=0 // pred_region
    _
  $region13: #{score_predictor.3} parent=0 // pred_fallthru
    _
  %v14 = vld [vmem:[%s0] sm:$0xff]
  %v15 = vld [vmem:[%s0 + $0x8] sm:$0xff]
  %v16 = vld [vmem:[%s1] sm:$0xff]
  %v17 = vld [vmem:[%s1 + $0x8] sm:$0xff]
  %v18 = vsub.f32 %v14, %v16
  %v19 = vsub.f32 %v15, %v17
  %v20 = vld [vmem:[%s2] sm:$0x1]
  %v22 = vlaneseq
  %v23 = vshrl.u32 %v22, 7
  %v24 = vsub.s32 0, %v23
  %v25 = vrot.slane %v20, %v24
  %v27 = vadd.f32 %v18, %v25
  %v28 = vadd.f32 %v19, %v25
  %vm29 = vcmask 64512
  %30 = vst.msk [vmem:[%s3] sm:$0xff] %vm29, %v27
  %31 = vst.msk [vmem:[%s3 + $0x8] sm:$0xff] %vm29, %v28
  // Predicated region
  $region14: #{score_predictor.3} parent=0 // pred_check
    _
  $region15: #{score_predictor.3} parent=0 // pred_check_branch
    %33 = sbr.rel (0) target = $region17
  $region16: #{score_predictor.3} parent=0 // pred_region
    _
  $region17: #{score_predictor.3} parent=0 // pred_fallthru
    _
  // Predicated region
  $region18: #{score_predictor.3} parent=0 // pred_check
    _
  $region19: #{score_predictor.3} parent=0 // pred_check_branch
    %35 = sbr.rel (0) target = $region21
  $region20: #{score_predictor.3} parent=0 // pred_region
    _
  $region21: #{score_predictor.3} parent=0 // pred_fallthru
    _

</llo_original>
